<compile_context>
chip_gen: v7x
topology: tpu7x:2x2x1
jax: 0.10.0
libtpu: 0.0.40
codegen_flags: <defaults>
</compile_context>

<pallas_src>
import math
import numpy as np
import jax
import jax.numpy as jnp
from jax.experimental import pallas as pl
from jax.experimental.pallas import tpu as pltpu


# ----------------------------------------------------------------------------
# Tiling helpers (shared by init-time padding and the wrapper)
# ----------------------------------------------------------------------------
_TM_CAP = 512    # matmul-row tile cap (N*C folded)
_TK_CAP = 1024   # reduction (Q = Hp*Wp) tile cap
_TP_CAP = 1024   # output-lane (P = Hc*Wc) tile cap


def _round_up(x, m):
    return (x + m - 1) // m * m


def _tile_and_pad(dim, align, cap):
    """Tile size (multiple of `align`, <= cap) and the padded extent it divides."""
    padded = _round_up(dim, align)
    if padded <= cap:
        return padded, padded
    n_tiles = -(-padded // cap)
    tile = _round_up(-(-padded // n_tiles), align)
    return tile, tile * n_tiles


def _sublane_align(dtype):
    # f32 -> 8 sublanes, bf16 -> 16, int8/fp8 -> 32
    return {4: 8, 2: 16, 1: 32}.get(jnp.dtype(dtype).itemsize, 8)


# ----------------------------------------------------------------------------
# Init-time parameter construction (mirror of Polar2Cart.__init__, mode='in')
# ----------------------------------------------------------------------------
def build_resample_matrix(polar_size, cart_size, center_drop_grid_size=3.0,
                          dtype=jnp.bfloat16):
    """Build padded Mt (Qp, Pp) in `dtype` and keep (1, Pp) in f32.

    dtype=jnp.bfloat16 (default) gives MXU-native operands and halves the Mt
    HBM/VMEM stream; dtype=jnp.float32 keeps full precision.
    """
    Hp, Wp = polar_size
    Hc, Wc = cart_size
    yy_org, xx_org = np.meshgrid(np.arange(Hc), np.arange(Wc), indexing="ij")
    yy = yy_org - Hc / 2.0 + 0.5
    xx = xx_org - Wc / 2.0 + 0.5
    depth = np.sqrt(xx ** 2 + yy ** 2)
    phi = np.pi - np.arctan2(yy, xx)
    index_y = depth / (Hc / 2.0 * np.sqrt(2.0)) * (Hp + center_drop_grid_size) \
        - center_drop_grid_size
    index_x = phi / np.pi / 2.0 * Wp
    mask = (index_y > 0).reshape(-1)

    # normalized grid_sample coords (note the -index_y, as in the torch module)
    gx = (index_x / Wp * 2.0 - 1.0).reshape(-1)
    gy = -(index_y / Hp * 2.0 - 1.0).reshape(-1)

    # align_corners=True pixel coordinates
    fx = (gx + 1.0) / 2.0 * (Wp - 1)
    fy = (gy + 1.0) / 2.0 * (Hp - 1)
    x0 = np.floor(fx).astype(np.int64)
    y0 = np.floor(fy).astype(np.int64)
    x1 = x0 + 1
    y1 = y0 + 1
    wx1 = fx - x0
    wx0 = 1.0 - wx1
    wy1 = fy - y0
    wy0 = 1.0 - wy1

    P = Hc * Wc
    Q = Hp * Wp
    M = np.zeros((P, Q), dtype=np.float32)
    rows = np.arange(P)
    for xi, yi, w in ((x0, y0, wx0 * wy0), (x1, y0, wx1 * wy0),
                      (x0, y1, wx0 * wy1), (x1, y1, wx1 * wy1)):
        inb = (xi >= 0) & (xi < Wp) & (yi >= 0) & (yi < Hp) & mask
        idx = np.clip(yi, 0, Hp - 1) * Wp + np.clip(xi, 0, Wp - 1)
        np.add.at(M, (rows, idx), np.where(inb, w, 0.0).astype(np.float32))

    keep = np.where(mask, 0.0, 1.0).astype(np.float32)

    # Pad Q / P to tile-aligned extents so tiled BlockSpecs satisfy the (8,128)
    # constraint and output stores are full-lane (unmasked) vst.
    _, Qp = _tile_and_pad(Q, 128, _TK_CAP)
    _, Pp = _tile_and_pad(P, 128, _TP_CAP)
    mt_pad = np.zeros((Qp, Pp), dtype=np.float32)
    mt_pad[:Q, :P] = M.T            # (Q, P): matmul output is lane-dense
    keep_pad = np.zeros((1, Pp), dtype=np.float32)
    keep_pad[0, :P] = keep
    return jnp.asarray(mt_pad, dtype), jnp.asarray(keep_pad, jnp.float32)


# ----------------------------------------------------------------------------
# Pallas kernels: tiled  out = keep * ref + polar @ Mt  (rows = N*C folded)
# ----------------------------------------------------------------------------
def _p2c_kernel_out_acc(mt_ref, keep_ref, polar_ref, ref_ref, out_ref):
    """f32 output: accumulate directly into the k-resident out block."""
    k = pl.program_id(2)

    @pl.when(k == 0)
    def _seed():
        out_ref[...] = keep_ref[...] * ref_ref[...]           # VPU blend

    out_ref[...] += jnp.dot(polar_ref[...].astype(mt_ref.dtype), mt_ref[...],
                            preferred_element_type=jnp.float32)   # MXU


def _p2c_kernel_scratch_acc(mt_ref, keep_ref, polar_ref, ref_ref, out_ref,
                            acc_ref):
    """Generic output dtype: f32 VMEM accumulator + finalize cast."""
    k = pl.program_id(2)

    @pl.when(k == 0)
    def _seed():
        acc_ref[...] = keep_ref[...] * ref_ref[...].astype(jnp.float32)

    acc_ref[...] += jnp.dot(polar_ref[...].astype(mt_ref.dtype), mt_ref[...],
                            preferred_element_type=jnp.float32)

    @pl.when(k == pl.num_programs(2) - 1)
    def _store():
        out_ref[...] = acc_ref[...].astype(out_ref.dtype)


def _polar2cart(polar_feat, ref_feat, mt, keep):
    N, C, Hp, Wp = polar_feat.shape
    Nr, Cr, Hc, Wc = ref_feat.shape
    assert N == Nr and C == Cr
    Q, P = Hp * Wp, Hc * Wc

    TK, Qp = _tile_and_pad(Q, 128, _TK_CAP)
    TP, Pp = _tile_and_pad(P, 128, _TP_CAP)
    assert mt.shape == (Qp, Pp), (mt.shape, (Qp, Pp))
    assert keep.shape == (1, Pp), (keep.shape, (1, Pp))

    M = N * C
    m_align = max(_sublane_align(polar_feat.dtype), _sublane_align(ref_feat.dtype))
    TM, Mp = _tile_and_pad(M, m_align, _TM_CAP)

    # Guarantee >= 2 independent (m, p) tiles so both v7x TensorCores get work
    # from the 'parallel' axes (harmless on single-TC v5e/v6e).
    if Mp // TM == 1 and Pp // TP == 1 and TP % 256 == 0:
        TP //= 2

    grid = (Mp // TM, Pp // TP, Qp // TK)   # reduction (q) axis last

    # Fold batch & channel into the matmul M dimension; pad only when needed
    # (pads / output slice are extra HBM passes — skip them in the aligned case).
    polar_in = polar_feat.reshape(M, Q)
    ref_in = ref_feat.reshape(M, P)
    if (Mp, Qp) != (M, Q):
        polar_in = jnp.pad(polar_in, ((0, Mp - M), (0, Qp - Q)))
    if (Mp, Pp) != (M, P):
        ref_in = jnp.pad(ref_in, ((0, Mp - M), (0, Pp - P)))

    out_dtype = ref_feat.dtype
    if out_dtype == jnp.float32:
        kernel = _p2c_kernel_out_acc        # no scratch, no finalize copy
        scratch_shapes = []
    else:
        kernel = _p2c_kernel_scratch_acc
        scratch_shapes = [pltpu.VMEM((TM, TP), jnp.float32)]

    # Multi-buffer the Mt stream when there are several reduction steps.
    mt_index_map = lambda i, j, k: (k, j)
    if grid[2] > 1:
        try:
            mt_spec = pl.BlockSpec((TK, TP), mt_index_map,
                                   pipeline_mode=pl.Buffered(3))
        except Exception:   # older jax without pipeline_mode / Buffered
            mt_spec = pl.BlockSpec((TK, TP), mt_index_map)
    else:
        mt_spec = pl.BlockSpec((TK, TP), mt_index_map)

    # VMEM budget from the actual tile footprint, capped well under v7x's
    # 64 MiB physical VMEM.
    mt_bytes = jnp.dtype(mt.dtype).itemsize
    io_bytes = jnp.dtype(out_dtype).itemsize
    footprint = (3 * TK * TP * mt_bytes                               # Mt
                 + 2 * TM * TK * jnp.dtype(polar_feat.dtype).itemsize  # polar
                 + 2 * TP * 4                                          # keep
                 + 2 * TM * TP * io_bytes * 2                          # ref+out
                 + TM * TP * 4)                                        # acc
    vmem_limit = int(min(max(2 * footprint, 16 << 20), 48 << 20))

    out_pad = pl.pallas_call(
        kernel,
        out_shape=jax.ShapeDtypeStruct((Mp, Pp), out_dtype),
        grid_spec=pltpu.PrefetchScalarGridSpec(
            num_scalar_prefetch=0,
            grid=grid,
            in_specs=[
                mt_spec,                                          # Mt   (TK, TP)
                pl.BlockSpec((1, TP), lambda i, j, k: (0, j)),    # keep (1,  TP)
                pl.BlockSpec((TM, TK), lambda i, j, k: (i, k)),   # polar(TM, TK)
                pl.BlockSpec((TM, TP), lambda i, j, k: (i, j)),   # ref  (TM, TP)
            ],
            out_specs=pl.BlockSpec((TM, TP), lambda i, j, k: (i, j)),
            scratch_shapes=scratch_shapes,
        ),
        compiler_params=pltpu.CompilerParams(
            dimension_semantics=("parallel", "parallel", "arbitrary"),
            vmem_limit_bytes=vmem_limit,
        ),
    )(mt, keep, polar_in, ref_in)

    if (Mp, Pp) != (M, P):
        out_pad = out_pad[:M, :P]
    return out_pad.reshape(N, C, Hc, Wc)


polar2cart = jax.jit(_polar2cart)


# ----------------------------------------------------------------------------
# Independent (numpy, per-point) reference of the PyTorch forward
# ----------------------------------------------------------------------------
def reference_forward(polar, ref, polar_size, cart_size, cdg=3.0):
    polar = np.asarray(polar, np.float64)
    out = np.asarray(ref, np.float64).copy()
    N, C, Hp, Wp = polar.shape
    Hc, Wc = cart_size
    for r in range(Hc):
        for c in range(Wc):
            yy = r - Hc / 2.0 + 0.5
            xx = c - Wc / 2.0 + 0.5
            depth = math.sqrt(xx * xx + yy * yy)
            phi = math.pi - math.atan2(yy, xx)
            iy = depth / (Hc / 2.0 * math.sqrt(2.0)) * (Hp + cdg) - cdg
            ix = phi / math.pi / 2.0 * Wp
            if not (iy > 0):
                continue
            gx = ix / Wp * 2.0 - 1.0
            gy = -(iy / Hp * 2.0 - 1.0)
            fx = (gx + 1.0) / 2.0 * (Wp - 1)
            fy = (gy + 1.0) / 2.0 * (Hp - 1)
            x0 = math.floor(fx)
            y0 = math.floor(fy)
            val = np.zeros((N, C))
            for xi, yi, w in (
                (x0,     y0,     (1 - (fx - x0)) * (1 - (fy - y0))),
                (x0 + 1, y0,     (fx - x0) * (1 - (fy - y0))),
                (x0,     y0 + 1, (1 - (fx - x0)) * (fy - y0)),
                (x0 + 1, y0 + 1, (fx - x0) * (fy - y0)),
            ):
                if 0 <= xi < Wp and 0 <= yi < Hp:
                    val += w * polar[:, :, int(yi), int(xi)]
            out[:, :, r, c] = val
    return out


if __name__ == "__main__":
    N, C = 2, 4
    polar_size = (16, 16)
    cart_size = (16, 16)

    key = jax.random.PRNGKey(0)
    k1, k2 = jax.random.split(key)
    polar_feat = jax.random.normal(k1, (N, C, *polar_size), jnp.float32)
    ref_feat = jax.random.normal(k2, (N, C, *cart_size), jnp.float32)

    # bf16 Mt: MXU-native operands on v5e/v6e/v7x, halves the Mt HBM stream.
    mt, keep = build_resample_matrix(polar_size, cart_size, dtype=jnp.bfloat16)

    out = jax.block_until_ready(polar2cart(polar_feat, ref_feat, mt, keep))

    ref_out = reference_forward(np.asarray(polar_feat), np.asarray(ref_feat),
                                polar_size, cart_size)
    max_err = np.abs(np.asarray(out, np.float64) - ref_out).max()
    # bf16 bilinear weights / polar operands -> relaxed tolerance
    # (the f32-Mt path reproduces the reference to ~1e-6).
    assert max_err < 5e-2, f"max abs error {max_err}"

    print("KERNEL_OK")
</pallas_src>

<mosaic_0001>
module attributes {stable_mosaic.version = 11 : i64} {
  func.func @_p2c_kernel_out_acc(%arg0: i32, %arg1: i32, %arg2: i32, %arg3: memref<256x128xbf16, #tpu.memory_space<vmem>>, %arg4: memref<1x128xf32, #tpu.memory_space<vmem>>, %arg5: memref<8x256xf32, #tpu.memory_space<vmem>>, %arg6: memref<8x128xf32, #tpu.memory_space<vmem>>, %arg7: memref<8x128xf32, #tpu.memory_space<vmem>>) attributes {dimension_semantics = [#tpu.dimension_semantics<parallel>, #tpu.dimension_semantics<parallel>, #tpu.dimension_semantics<arbitrary>], iteration_bounds = array<i64: 1, 2, 1>, scalar_prefetch = 0 : i64, scratch_operands = 0 : i64, tpu.core_type = #tpu.core_type<tc>, window_params = [{transform_indices = @transform_0, window_bounds = array<i64: 256, 128>}, {transform_indices = @transform_1, window_bounds = array<i64: 1, 128>}, {transform_indices = @transform_2, window_bounds = array<i64: 8, 256>}, {transform_indices = @transform_3, window_bounds = array<i64: 8, 128>}, {transform_indices = @transform_4, window_bounds = array<i64: 8, 128>}]} {
    %c0_i32 = arith.constant 0 : i32
    %0 = arith.cmpi eq, %arg2, %c0_i32 : i32
    %1 = arith.extui %0 : i1 to i32
    %c0_i32_0 = arith.constant 0 : i32
    %2 = arith.cmpi ne, %1, %c0_i32_0 : i32
    scf.if %2 {
      %c0_8 = arith.constant 0 : index
      %c0_9 = arith.constant 0 : index
      %10 = vector.load %arg4[%c0_8, %c0_9] : memref<1x128xf32, #tpu.memory_space<vmem>>, vector<1x128xf32>
      %c0_10 = arith.constant 0 : index
      %c0_11 = arith.constant 0 : index
      %11 = vector.load %arg6[%c0_10, %c0_11] : memref<8x128xf32, #tpu.memory_space<vmem>>, vector<8x128xf32>
      %12 = vector.broadcast %10 : vector<1x128xf32> to vector<8x128xf32>
      %13 = arith.mulf %12, %11 : vector<8x128xf32>
      %c0_12 = arith.constant 0 : index
      %c0_13 = arith.constant 0 : index
      %14 = vector.load %arg7[%c0_12, %c0_13] : memref<8x128xf32, #tpu.memory_space<vmem>>, vector<8x128xf32>
      tpu.vector_store %arg7[%c0_12, %c0_13], %13 {strides = array<i32>} : memref<8x128xf32, #tpu.memory_space<vmem>>, vector<8x128xf32>,
    } else {
    }
    %c0 = arith.constant 0 : index
    %c0_1 = arith.constant 0 : index
    %3 = vector.load %arg7[%c0, %c0_1] : memref<8x128xf32, #tpu.memory_space<vmem>>, vector<8x128xf32>
    %c0_2 = arith.constant 0 : index
    %c0_3 = arith.constant 0 : index
    %4 = vector.load %arg5[%c0_2, %c0_3] : memref<8x256xf32, #tpu.memory_space<vmem>>, vector<8x256xf32>
    %5 = arith.truncf %4 : vector<8x256xf32> to vector<8x256xbf16>
    %c0_4 = arith.constant 0 : index
    %c0_5 = arith.constant 0 : index
    %6 = vector.load %arg3[%c0_4, %c0_5] : memref<256x128xbf16, #tpu.memory_space<vmem>>, vector<256x128xbf16>
    %cst = arith.constant dense<0.000000e+00> : vector<8x128xf32>
    %7 = tpu.matmul %5, %6, %cst {dimension_numbers = #tpu.dot_dimension_numbers<[1], [0], [0], [1], [0, 0, 1, 1], [], []>} : vector<8x256xbf16>, vector<256x128xbf16>, vector<8x128xf32> -> vector<8x128xf32>
    %8 = arith.addf %3, %7 : vector<8x128xf32>
    %c0_6 = arith.constant 0 : index
    %c0_7 = arith.constant 0 : index
    %9 = vector.load %arg7[%c0_6, %c0_7] : memref<8x128xf32, #tpu.memory_space<vmem>>, vector<8x128xf32>
    tpu.vector_store %arg7[%c0_6, %c0_7], %8 {strides = array<i32>} : memref<8x128xf32, #tpu.memory_space<vmem>>, vector<8x128xf32>,
    return
  }
  func.func @transform_0(%arg0: i32, %arg1: i32, %arg2: i32) -> (i32, i32) {
    %c0_i32 = arith.constant 0 : i32
    return %arg2, %arg1 : i32, i32
  }
  func.func @transform_1(%arg0: i32, %arg1: i32, %arg2: i32) -> (i32, i32) {
    %c0_i32 = arith.constant 0 : i32
    %c0_i32_0 = arith.constant 0 : i32
    return %c0_i32, %arg1 : i32, i32
  }
  func.func @transform_2(%arg0: i32, %arg1: i32, %arg2: i32) -> (i32, i32) {
    %c0_i32 = arith.constant 0 : i32
    return %arg0, %arg2 : i32, i32
  }
  func.func @transform_3(%arg0: i32, %arg1: i32, %arg2: i32) -> (i32, i32) {
    %c0_i32 = arith.constant 0 : i32
    return %arg0, %arg1 : i32, i32
  }
  func.func @transform_4(%arg0: i32, %arg1: i32, %arg2: i32) -> (i32, i32) {
    %c0_i32 = arith.constant 0 : i32
    return %arg0, %arg1 : i32, i32
  }
}

</mosaic_0001>

<llo_original>
// kernel: _polar2cart.1
$region0: #{_polar2cart.1}
  #allocation0 [shape = 'u32[]', space=smem, size = 0x4, offset = 0x4, fixed_abs, tag = 'smem constant byte address 0x4 - core index']
  #allocation1 [shape = 'u32[144,128]{1,0:T(1,128)}', space=vmem, size = 0x12000, scoped, tag = 'internal scratch']
  %s0 = inlined_call_operand.vmem [shape: bf16[256,256], index: 0, kind: input, shape index: {}]
  %s1 = inlined_call_operand.vmem [shape: f32[1,256], index: 1, kind: input, shape index: {}]
  %s2 = inlined_call_operand.vmem [shape: f32[8,256], index: 2, kind: input, shape index: {}]
  %s3 = inlined_call_operand.vmem [shape: f32[8,256], index: 3, kind: input, shape index: {}]
  %s4 = inlined_call_operand.vmem [shape: f32[8,256], index: 4, kind: output, shape index: {}]
  %s5 = sld [smem:[#allocation0]]
  $region94: #{_polar2cart.1} parent=0
    _
  %s7 = ssub.s32 1, %s5
  %s8 = scalar_select 0, %s7, %s5
  $region1: #{_polar2cart.1} parent=0
    #allocation2 [shape = 'u8[131072]{0}', space=vmem, size = 0x20000, scoped, tag = 'input window, operand 0']
    loop: start=0, step=1, limit=4
    $region2: #{_polar2cart.1} parent=1 // loop_pre_header
      _
    $region3: #{_polar2cart.1} parent=1 // loop_header
      %s10 = sphi 0, %s14
      %p11 = scmp.ge.s32.totalorder %s10, 4
      %s17 = sphi 0, %s36
      %s18 = sphi 0, %s32
      %s19 = sphi 0, %s28
      %s20 = sphi 0, %s17
      %s21 = sphi 0, %s18
      %s22 = sphi 0, %s19
      %s23 = sphi 0, %s20
      %s24 = sphi 0, %s21
      %s25 = sphi 0, %s22
      %s41 = sphi 0, %s43
      %s44 = sphi 0, %s41
      %s45 = sphi 0, %s44
      %s61 = sphi 0, %s45
      %s67 = sphi 0, %s69
      %s70 = sphi 0, %s67
      %s71 = sphi 0, %s70
      %s87 = sphi 0, %s71
      %s95 = sphi 0, %s97
      %s98 = sphi 0, %s95
      %s99 = sphi 0, %s98
      %s115 = sphi 0, %s99
      %s123 = sphi 0, %s125
      %s126 = sphi 0, %s123
      %s127 = sphi 0, %s126
      %s143 = sphi 0, %s127
      %s151 = sphi 0, %s153
      %s154 = sphi 0, %s151
      %s155 = sphi 0, %s154
      %s171 = sphi 0, %s155
    $region4: #{_polar2cart.1} parent=1 // loop_header_branch
      %13 = sbr.rel (%p11) target = $region8
    $region5: #{_polar2cart.1} parent=1 // loop_body
      %s15 = ssub.s32 %s10, 1
      %s16 = ssub.s32 %s10, 2
      %s26 = sadd.s32 1, %s19
      %p27 = scmp.ge.s32.totalorder %s26, 1
      %s28 = scalar_select %p27, 0, %s26
      %s29 = sadd.s32 1, %s18
      %s30 = scalar_select %p27, %s29, %s18
      %p31 = scmp.ge.s32.totalorder %s30, 2
      %s32 = scalar_select %p31, 0, %s30
      %s33 = sadd.s32 1, %s17
      %s34 = scalar_select %p31, %s33, %s17
      %p35 = scmp.ge.s32.totalorder %s34, 1
      %s36 = scalar_select %p35, 0, %s34
      %s37 = ssub.s32 %s19, %s28
      %s38 = ssub.s32 %s18, %s32
      %s39 = sor.u32 %s37, %s38
      %p40 = scmp.eq.s32.totalorder %s39, 0
      %s42 = sadd.s32 %s41, 1
      %s43 = scalar_select %p40, %s41, %s42
      %p46 = pneg %p40
      %p47 = scmp.eq.s32.totalorder %s10, 1
      %p48 = por %p46, %p47
      %p49 = scmp.ne.s32.totalorder %s41, %s44
      %p50 = scmp.eq.s32.totalorder %s10, 0
      %p51 = por %p49, %p50
      %p52 = scmp.ne.s32.totalorder %s41, %s44
      %p53 = scmp.eq.s32.totalorder %s15, 1
      %p54 = por %p52, %p53
      %p55 = scmp.ne.s32.totalorder %s44, %s45
      %p56 = scmp.eq.s32.totalorder %s15, 0
      %p57 = por %p55, %p56
      %p58 = scmp.ne.s32.totalorder %s44, %s45
      %p59 = scmp.eq.s32.totalorder %s16, 1
      %p60 = por %p58, %p59
      %p62 = scmp.ne.s32.totalorder %s45, %s61
      %p63 = scmp.eq.s32.totalorder %s16, 0
      %p64 = por %p62, %p63
      %s65 = ssub.s32 %s18, %s32
      %p66 = scmp.eq.s32.totalorder %s65, 0
      %s68 = sadd.s32 %s67, 1
      %s69 = scalar_select %p66, %s67, %s68
      %p72 = pneg %p66
      %p73 = scmp.eq.s32.totalorder %s10, 1
      %p74 = por %p72, %p73
      %p75 = scmp.ne.s32.totalorder %s67, %s70
      %p76 = scmp.eq.s32.totalorder %s10, 0
      %p77 = por %p75, %p76
      %p78 = scmp.ne.s32.totalorder %s67, %s70
      %p79 = scmp.eq.s32.totalorder %s15, 1
      %p80 = por %p78, %p79
      %p81 = scmp.ne.s32.totalorder %s70, %s71
      %p82 = scmp.eq.s32.totalorder %s15, 0
      %p83 = por %p81, %p82
      %p84 = scmp.ne.s32.totalorder %s70, %s71
      %p85 = scmp.eq.s32.totalorder %s16, 1
      %p86 = por %p84, %p85
      %p88 = scmp.ne.s32.totalorder %s71, %s87
      %p89 = scmp.eq.s32.totalorder %s16, 0
      %p90 = por %p88, %p89
      %s91 = ssub.s32 %s17, %s36
      %s92 = ssub.s32 %s19, %s28
      %s93 = sor.u32 %s91, %s92
      %p94 = scmp.eq.s32.totalorder %s93, 0
      %s96 = sadd.s32 %s95, 1
      %s97 = scalar_select %p94, %s95, %s96
      %p100 = pneg %p94
      %p101 = scmp.eq.s32.totalorder %s10, 1
      %p102 = por %p100, %p101
      %p103 = scmp.ne.s32.totalorder %s95, %s98
      %p104 = scmp.eq.s32.totalorder %s10, 0
      %p105 = por %p103, %p104
      %p106 = scmp.ne.s32.totalorder %s95, %s98
      %p107 = scmp.eq.s32.totalorder %s15, 1
      %p108 = por %p106, %p107
      %p109 = scmp.ne.s32.totalorder %s98, %s99
      %p110 = scmp.eq.s32.totalorder %s15, 0
      %p111 = por %p109, %p110
      %p112 = scmp.ne.s32.totalorder %s98, %s99
      %p113 = scmp.eq.s32.totalorder %s16, 1
      %p114 = por %p112, %p113
      %p116 = scmp.ne.s32.totalorder %s99, %s115
      %p117 = scmp.eq.s32.totalorder %s16, 0
      %p118 = por %p116, %p117
      %s119 = ssub.s32 %s17, %s36
      %s120 = ssub.s32 %s18, %s32
      %s121 = sor.u32 %s119, %s120
      %p122 = scmp.eq.s32.totalorder %s121, 0
      %s124 = sadd.s32 %s123, 1
      %s125 = scalar_select %p122, %s123, %s124
      %p128 = pneg %p122
      %p129 = scmp.eq.s32.totalorder %s10, 1
      %p130 = por %p128, %p129
      %p131 = scmp.ne.s32.totalorder %s123, %s126
      %p132 = scmp.eq.s32.totalorder %s10, 0
      %p133 = por %p131, %p132
      %p134 = scmp.ne.s32.totalorder %s123, %s126
      %p135 = scmp.eq.s32.totalorder %s15, 1
      %p136 = por %p134, %p135
      %p137 = scmp.ne.s32.totalorder %s126, %s127
      %p138 = scmp.eq.s32.totalorder %s15, 0
      %p139 = por %p137, %p138
      %p140 = scmp.ne.s32.totalorder %s126, %s127
      %p141 = scmp.eq.s32.totalorder %s16, 1
      %p142 = por %p140, %p141
      %p144 = scmp.ne.s32.totalorder %s127, %s143
      %p145 = scmp.eq.s32.totalorder %s16, 0
      %p146 = por %p144, %p145
      %s147 = ssub.s32 %s17, %s36
      %s148 = ssub.s32 %s18, %s32
      %s149 = sor.u32 %s147, %s148
      %p150 = scmp.eq.s32.totalorder %s149, 0
      %s152 = sadd.s32 %s151, 1
      %s153 = scalar_select %p150, %s151, %s152
      %p156 = pneg %p150
      %p157 = scmp.eq.s32.totalorder %s10, 1
      %p158 = por %p156, %p157
      %p159 = scmp.ne.s32.totalorder %s151, %s154
      %p160 = scmp.eq.s32.totalorder %s10, 0
      %p161 = por %p159, %p160
      %p162 = scmp.ne.s32.totalorder %s151, %s154
      %p163 = scmp.eq.s32.totalorder %s15, 1
      %p164 = por %p162, %p163
      %p165 = scmp.ne.s32.totalorder %s154, %s155
      %p166 = scmp.eq.s32.totalorder %s15, 0
      %p167 = por %p165, %p166
      %p168 = scmp.ne.s32.totalorder %s154, %s155
      %p169 = scmp.eq.s32.totalorder %s16, 1
      %p170 = por %p168, %p169
      %p172 = scmp.ne.s32.totalorder %s155, %s171
      %p173 = scmp.eq.s32.totalorder %s16, 0
      %p174 = por %p172, %p173
      %p175 = scmp.le.s32.totalorder 1, %s10
      %p176 = scmp.lt.s32.totalorder %s10, 3
      %p177 = pnand %p175, %p176
      %p178 = pneg %p177
      // Predicated region
      $region9: #{_polar2cart.1} parent=5 // pred_check
        _
      $region10: #{_polar2cart.1} parent=5 // pred_check_branch
        %180 = sbr.rel (%p177) target = $region12
      $region11: #{_polar2cart.1} parent=5 // pred_region
        %s181 = ssub.s32 %s10, 1
        // Predicated region
        $region13: #{_polar2cart.1} parent=11 // pred_check
          %p182 = pneg %p111
        $region14: #{_polar2cart.1} parent=11 // pred_check_branch
          %184 = sbr.rel (%p182) target = $region16
        $region15: #{_polar2cart.1} parent=11 // pred_region
          %s185 = smul.u32 2, %s22
          %p186 = scmp.lt.s32.totalorder %s20, 0
          %s187 = scalar_select %p186, %s20, 0
          %p188 = scmp.lt.s32.totalorder %s185, 1
          %s189 = scalar_select %p188, %s185, 1
          %s190 = smul.addr %s187, 2
          %s191 = sadd.s32 %s189, %s190
          %s192 = smul.addr %s191, 8
          %s193 = scalar_lea.vmem %s2, %s192
          %s194 = smul.u32 2, %s22
        $region16: #{_polar2cart.1} parent=11 // pred_fallthru
          _
      $region12: #{_polar2cart.1} parent=5 // pred_fallthru
        _
      %p195 = scmp.lt.s32.totalorder %s10, 2
      // Predicated region
      $region17: #{_polar2cart.1} parent=5 // pred_check
        %p196 = pneg %p195
      $region18: #{_polar2cart.1} parent=5 // pred_check_branch
        %198 = sbr.rel (%p196) target = $region20
      $region19: #{_polar2cart.1} parent=5 // pred_region
        // Predicated region
        $region21: #{_polar2cart.1} parent=19 // pred_check
          %p199 = pneg %p51
        $region22: #{_polar2cart.1} parent=19 // pred_check_branch
          %201 = sbr.rel (%p199) target = $region24
        $region23: #{_polar2cart.1} parent=19 // pred_region
          %s202 = sand.u32 %s41, 1
          %s203 = sand.u32 %s41, 1
          %s204 = smul.addr %s203, 128
          %s205 = scalar_lea.vmem [#allocation2], %s204
          %s206 = smul.u32 32, %s19
          %s207 = smul.addr %s206, 2
          %s208 = sadd.s32 %s18, %s207
          %s209 = smul.addr %s208, 4
          %s210 = scalar_lea.vmem %s0, %s209
          // Predicated region
          $region25: #{_polar2cart.1} parent=23 // pred_check
            _
          $region26: #{_polar2cart.1} parent=23 // pred_check_branch
            %212 = sbr.rel (0) target = $region28
          $region27: #{_polar2cart.1} parent=23 // pred_region
            // Predicated region
            $region29: #{_polar2cart.1} parent=27 // pred_check
              _
            $region30: #{_polar2cart.1} parent=27 // pred_check_branch
              %214 = sbr.rel target = $region32
            $region31: #{_polar2cart.1} parent=27 // pred_region
              // Predicated region
              $region44: #{_polar2cart.1} parent=31 // pred_check
                _
              $region45: #{_polar2cart.1} parent=31 // pred_check_branch
                %291 = sbr.rel (0) target = $region47
              $region46: #{_polar2cart.1} parent=31 // pred_region
                loop: start=0, step=1, limit=1
                $region48: #{_polar2cart.1} parent=46 // loop_pre_header
                  _
                $region49: #{_polar2cart.1} parent=46 // loop_header
                  %s293 = sphi 0, %s297
                  %p294 = scmp.ge.s32.totalorder %s293, 1
                  %s298 = sphi %s210, %s210
                  %s299 = sphi %s205, %s205
                $region50: #{_polar2cart.1} parent=46 // loop_header_branch
                  %296 = sbr.rel (%p294) target = $region54
                $region51: #{_polar2cart.1} parent=46 // loop_body
                  _
                $region52: #{_polar2cart.1} parent=46 // loop_footer
                  %s297 = sadd.s32 1, %s293
                $region53: #{_polar2cart.1} parent=46 // loop_footer_branch
                  %292 = sbr.rel target = $region49
                $region54: #{_polar2cart.1} parent=46 // loop_exit
                  _
                loop: start=0, step=1, limit=1
                $region55: #{_polar2cart.1} parent=46 // loop_pre_header
                  _
                $region56: #{_polar2cart.1} parent=46 // loop_header
                  %s302 = sphi 0, %s306
                  %p303 = scmp.ge.s32.totalorder %s302, 1
                  %s307 = sphi %s210, %s210
                  %s308 = sphi %s205, %s205
                $region57: #{_polar2cart.1} parent=46 // loop_header_branch
                  %305 = sbr.rel (%p303) target = $region61
                $region58: #{_polar2cart.1} parent=46 // loop_body
                  %v309 = vld [vmem:[%s307] sm:$0xf]
                  %310 = vst [vmem:[%s308] sm:$0xf] %v309
                  %v311 = vld [vmem:[%s307 + $0x8] sm:$0xf]
                  %312 = vst [vmem:[%s308 + $0x4] sm:$0xf] %v311
                  %v313 = vld [vmem:[%s307 + $0x10] sm:$0xf]
                  %314 = vst [vmem:[%s308 + $0x8] sm:$0xf] %v313
                  %v315 = vld [vmem:[%s307 + $0x18] sm:$0xf]
                  %316 = vst [vmem:[%s308 + $0xc] sm:$0xf] %v315
                  %v317 = vld [vmem:[%s307 + $0x20] sm:$0xf]
                  %318 = vst [vmem:[%s308 + $0x10] sm:$0xf] %v317
                  %v319 = vld [vmem:[%s307 + $0x28] sm:$0xf]
                  %320 = vst [vmem:[%s308 + $0x14] sm:$0xf] %v319
                  %v321 = vld [vmem:[%s307 + $0x30] sm:$0xf]
                  %322 = vst [vmem:[%s308 + $0x18] sm:$0xf] %v321
                  %v323 = vld [vmem:[%s307 + $0x38] sm:$0xf]
                  %324 = vst [vmem:[%s308 + $0x1c] sm:$0xf] %v323
                  %v325 = vld [vmem:[%s307 + $0x40] sm:$0xf]
                  %326 = vst [vmem:[%s308 + $0x20] sm:$0xf] %v325
                  %v327 = vld [vmem:[%s307 + $0x48] sm:$0xf]
                  %328 = vst [vmem:[%s308 + $0x24] sm:$0xf] %v327
                  %v329 = vld [vmem:[%s307 + $0x50] sm:$0xf]
                  %330 = vst [vmem:[%s308 + $0x28] sm:$0xf] %v329
                  %v331 = vld [vmem:[%s307 + $0x58] sm:$0xf]
                  %332 = vst [vmem:[%s308 + $0x2c] sm:$0xf] %v331
                  %v333 = vld [vmem:[%s307 + $0x60] sm:$0xf]
                  %334 = vst [vmem:[%s308 + $0x30] sm:$0xf] %v333
                  %v335 = vld [vmem:[%s307 + $0x68] sm:$0xf]
                  %336 = vst [vmem:[%s308 + $0x34] sm:$0xf] %v335
                  %v337 = vld [vmem:[%s307 + $0x70] sm:$0xf]
                  %338 = vst [vmem:[%s308 + $0x38] sm:$0xf] %v337
                  %v339 = vld [vmem:[%s307 + $0x78] sm:$0xf]
                  %340 = vst [vmem:[%s308 + $0x3c] sm:$0xf] %v339
                  %v341 = vld [vmem:[%s307 + $0x80] sm:$0xf]
                  %342 = vst [vmem:[%s308 + $0x40] sm:$0xf] %v341
                  %v343 = vld [vmem:[%s307 + $0x88] sm:$0xf]
                  %344 = vst [vmem:[%s308 + $0x44] sm:$0xf] %v343
                  %v345 = vld [vmem:[%s307 + $0x90] sm:$0xf]
                  %346 = vst [vmem:[%s308 + $0x48] sm:$0xf] %v345
                  %v347 = vld [vmem:[%s307 + $0x98] sm:$0xf]
                  %348 = vst [vmem:[%s308 + $0x4c] sm:$0xf] %v347
                  %v349 = vld [vmem:[%s307 + $0xa0] sm:$0xf]
                  %350 = vst [vmem:[%s308 + $0x50] sm:$0xf] %v349
                  %v351 = vld [vmem:[%s307 + $0xa8] sm:$0xf]
                  %352 = vst [vmem:[%s308 + $0x54] sm:$0xf] %v351
                  %v353 = vld [vmem:[%s307 + $0xb0] sm:$0xf]
                  %354 = vst [vmem:[%s308 + $0x58] sm:$0xf] %v353
                  %v355 = vld [vmem:[%s307 + $0xb8] sm:$0xf]
                  %356 = vst [vmem:[%s308 + $0x5c] sm:$0xf] %v355
                  %v357 = vld [vmem:[%s307 + $0xc0] sm:$0xf]
                  %358 = vst [vmem:[%s308 + $0x60] sm:$0xf] %v357
                  %v359 = vld [vmem:[%s307 + $0xc8] sm:$0xf]
                  %360 = vst [vmem:[%s308 + $0x64] sm:$0xf] %v359
                  %v361 = vld [vmem:[%s307 + $0xd0] sm:$0xf]
                  %362 = vst [vmem:[%s308 + $0x68] sm:$0xf] %v361
                  %v363 = vld [vmem:[%s307 + $0xd8] sm:$0xf]
                  %364 = vst [vmem:[%s308 + $0x6c] sm:$0xf] %v363
                  %v365 = vld [vmem:[%s307 + $0xe0] sm:$0xf]
                  %366 = vst [vmem:[%s308 + $0x70] sm:$0xf] %v365
                  %v367 = vld [vmem:[%s307 + $0xe8] sm:$0xf]
                  %368 = vst [vmem:[%s308 + $0x74] sm:$0xf] %v367
                  %v369 = vld [vmem:[%s307 + $0xf0] sm:$0xf]
                  %370 = vst [vmem:[%s308 + $0x78] sm:$0xf] %v369
                  %v371 = vld [vmem:[%s307 + $0xf8] sm:$0xf]
                  %372 = vst [vmem:[%s308 + $0x7c] sm:$0xf] %v371
                $region59: #{_polar2cart.1} parent=46 // loop_footer
                  %s306 = sadd.s32 1, %s302
                $region60: #{_polar2cart.1} parent=46 // loop_footer_branch
                  %301 = sbr.rel target = $region56
                $region61: #{_polar2cart.1} parent=46 // loop_exit
                  _
              $region47: #{_polar2cart.1} parent=31 // pred_fallthru
                _
            $region32: #{_polar2cart.1} parent=27 // pred_fallthru
              _
            // Predicated region
            $region33: #{_polar2cart.1} parent=27 // pred_check
              _
            $region34: #{_polar2cart.1} parent=27 // pred_check_branch
              %216 = sbr.rel (0) target = $region36
            $region35: #{_polar2cart.1} parent=27 // pred_region
              loop: start=0, step=1, limit=1
              $region37: #{_polar2cart.1} parent=35 // loop_pre_header
                _
              $region38: #{_polar2cart.1} parent=35 // loop_header
                %s219 = sphi 0, %s223
                %p220 = scmp.ge.s32.totalorder %s219, 1
                %s224 = sphi %s210, %s210
                %s225 = sphi %s205, %s205
              $region39: #{_polar2cart.1} parent=35 // loop_header_branch
                %222 = sbr.rel (%p220) target = $region43
              $region40: #{_polar2cart.1} parent=35 // loop_body
                %v226 = vld [vmem:[%s224] sm:$0xf]
                %227 = vst [vmem:[%s225] sm:$0xf] %v226
                %v228 = vld [vmem:[%s224 + $0x8] sm:$0xf]
                %229 = vst [vmem:[%s225 + $0x4] sm:$0xf] %v228
                %v230 = vld [vmem:[%s224 + $0x10] sm:$0xf]
                %231 = vst [vmem:[%s225 + $0x8] sm:$0xf] %v230
                %v232 = vld [vmem:[%s224 + $0x18] sm:$0xf]
                %233 = vst [vmem:[%s225 + $0xc] sm:$0xf] %v232
                %v234 = vld [vmem:[%s224 + $0x20] sm:$0xf]
                %235 = vst [vmem:[%s225 + $0x10] sm:$0xf] %v234
                %v236 = vld [vmem:[%s224 + $0x28] sm:$0xf]
                %237 = vst [vmem:[%s225 + $0x14] sm:$0xf] %v236
                %v238 = vld [vmem:[%s224 + $0x30] sm:$0xf]
                %239 = vst [vmem:[%s225 + $0x18] sm:$0xf] %v238
                %v240 = vld [vmem:[%s224 + $0x38] sm:$0xf]
                %241 = vst [vmem:[%s225 + $0x1c] sm:$0xf] %v240
                %v242 = vld [vmem:[%s224 + $0x40] sm:$0xf]
                %243 = vst [vmem:[%s225 + $0x20] sm:$0xf] %v242
                %v244 = vld [vmem:[%s224 + $0x48] sm:$0xf]
                %245 = vst [vmem:[%s225 + $0x24] sm:$0xf] %v244
                %v246 = vld [vmem:[%s224 + $0x50] sm:$0xf]
                %247 = vst [vmem:[%s225 + $0x28] sm:$0xf] %v246
                %v248 = vld [vmem:[%s224 + $0x58] sm:$0xf]
                %249 = vst [vmem:[%s225 + $0x2c] sm:$0xf] %v248
                %v250 = vld [vmem:[%s224 + $0x60] sm:$0xf]
                %251 = vst [vmem:[%s225 + $0x30] sm:$0xf] %v250
                %v252 = vld [vmem:[%s224 + $0x68] sm:$0xf]
                %253 = vst [vmem:[%s225 + $0x34] sm:$0xf] %v252
                %v254 = vld [vmem:[%s224 + $0x70] sm:$0xf]
                %255 = vst [vmem:[%s225 + $0x38] sm:$0xf] %v254
                %v256 = vld [vmem:[%s224 + $0x78] sm:$0xf]
                %257 = vst [vmem:[%s225 + $0x3c] sm:$0xf] %v256
                %v258 = vld [vmem:[%s224 + $0x80] sm:$0xf]
                %259 = vst [vmem:[%s225 + $0x40] sm:$0xf] %v258
                %v260 = vld [vmem:[%s224 + $0x88] sm:$0xf]
                %261 = vst [vmem:[%s225 + $0x44] sm:$0xf] %v260
                %v262 = vld [vmem:[%s224 + $0x90] sm:$0xf]
                %263 = vst [vmem:[%s225 + $0x48] sm:$0xf] %v262
                %v264 = vld [vmem:[%s224 + $0x98] sm:$0xf]
                %265 = vst [vmem:[%s225 + $0x4c] sm:$0xf] %v264
                %v266 = vld [vmem:[%s224 + $0xa0] sm:$0xf]
                %267 = vst [vmem:[%s225 + $0x50] sm:$0xf] %v266
                %v268 = vld [vmem:[%s224 + $0xa8] sm:$0xf]
                %269 = vst [vmem:[%s225 + $0x54] sm:$0xf] %v268
                %v270 = vld [vmem:[%s224 + $0xb0] sm:$0xf]
                %271 = vst [vmem:[%s225 + $0x58] sm:$0xf] %v270
                %v272 = vld [vmem:[%s224 + $0xb8] sm:$0xf]
                %273 = vst [vmem:[%s225 + $0x5c] sm:$0xf] %v272
                %v274 = vld [vmem:[%s224 + $0xc0] sm:$0xf]
                %275 = vst [vmem:[%s225 + $0x60] sm:$0xf] %v274
                %v276 = vld [vmem:[%s224 + $0xc8] sm:$0xf]
                %277 = vst [vmem:[%s225 + $0x64] sm:$0xf] %v276
                %v278 = vld [vmem:[%s224 + $0xd0] sm:$0xf]
                %279 = vst [vmem:[%s225 + $0x68] sm:$0xf] %v278
                %v280 = vld [vmem:[%s224 + $0xd8] sm:$0xf]
                %281 = vst [vmem:[%s225 + $0x6c] sm:$0xf] %v280
                %v282 = vld [vmem:[%s224 + $0xe0] sm:$0xf]
                %283 = vst [vmem:[%s225 + $0x70] sm:$0xf] %v282
                %v284 = vld [vmem:[%s224 + $0xe8] sm:$0xf]
                %285 = vst [vmem:[%s225 + $0x74] sm:$0xf] %v284
                %v286 = vld [vmem:[%s224 + $0xf0] sm:$0xf]
                %287 = vst [vmem:[%s225 + $0x78] sm:$0xf] %v286
                %v288 = vld [vmem:[%s224 + $0xf8] sm:$0xf]
                %289 = vst [vmem:[%s225 + $0x7c] sm:$0xf] %v288
              $region41: #{_polar2cart.1} parent=35 // loop_footer
                %s223 = sadd.s32 1, %s219
              $region42: #{_polar2cart.1} parent=35 // loop_footer_branch
                %218 = sbr.rel target = $region38
              $region43: #{_polar2cart.1} parent=35 // loop_exit
                _
            $region36: #{_polar2cart.1} parent=27 // pred_fallthru
              _
          $region28: #{_polar2cart.1} parent=23 // pred_fallthru
            _
          %373 = vnop
        $region24: #{_polar2cart.1} parent=19 // pred_fallthru
          _
        // Predicated region
        $region62: #{_polar2cart.1} parent=19 // pred_check
          %p374 = pneg %p77
        $region63: #{_polar2cart.1} parent=19 // pred_check_branch
          %376 = sbr.rel (%p374) target = $region65
        $region64: #{_polar2cart.1} parent=19 // pred_region
          %p377 = scmp.lt.s32.totalorder %s18, 1
          %s378 = scalar_select %p377, %s18, 1
          %s379 = scalar_lea.vmem %s1, %s378
        $region65: #{_polar2cart.1} parent=19 // pred_fallthru
          _
        // Predicated region
        $region66: #{_polar2cart.1} parent=19 // pred_check
          %p380 = pneg %p133
        $region67: #{_polar2cart.1} parent=19 // pred_check_branch
          %382 = sbr.rel (%p380) target = $region69
        $region68: #{_polar2cart.1} parent=19 // pred_region
          %p383 = scmp.lt.s32.totalorder %s17, 0
          %s384 = scalar_select %p383, %s17, 0
          %p385 = scmp.lt.s32.totalorder %s18, 1
          %s386 = scalar_select %p385, %s18, 1
          %s387 = smul.addr %s384, 2
          %s388 = sadd.s32 %s386, %s387
          %s389 = smul.addr %s388, 8
          %s390 = scalar_lea.vmem %s3, %s389
        $region69: #{_polar2cart.1} parent=19 // pred_fallthru
          _
      $region20: #{_polar2cart.1} parent=5 // pred_fallthru
        _
      %p391 = scmp.le.s32.totalorder 1, %s10
      %p392 = scmp.lt.s32.totalorder %s10, 3
      %p393 = pnand %p391, %p392
      %p394 = pneg %p393
      // Predicated region
      $region70: #{_polar2cart.1} parent=5 // pred_check
        _
      $region71: #{_polar2cart.1} parent=5 // pred_check_branch
        %396 = sbr.rel (%p393) target = $region73
      $region72: #{_polar2cart.1} parent=5 // pred_region
        %s397 = ssub.s32 %s10, 1
        %s398 = sand.u32 %s44, 1
        %s399 = sand.u32 %s44, 1
        %s400 = smul.addr %s399, 128
        %s401 = scalar_lea.vmem [#allocation2], %s400
        // Predicated region
        $region74: #{_polar2cart.1} parent=72 // pred_check
          %p402 = pneg %p57
        $region75: #{_polar2cart.1} parent=72 // pred_check_branch
          %404 = sbr.rel (%p402) target = $region77
        $region76: #{_polar2cart.1} parent=72 // pred_region
          _
        $region77: #{_polar2cart.1} parent=72 // pred_fallthru
          _
        %s405 = sand.u32 %s44, 1
        %s406 = sand.u32 %s44, 1
        %s407 = smul.addr %s406, 128
        %s408 = scalar_lea.vmem [#allocation2], %s407
        %p409 = pneg %p57
        %p410 = pneg %p54
        %p411 = scmp.lt.s32.totalorder %s21, 1
        %s412 = scalar_select %p411, %s21, 1
        %s413 = scalar_lea.vmem %s1, %s412
        %p414 = pneg %p83
        %p415 = pneg %p80
        %s416 = smul.u32 2, %s22
        %p417 = scmp.lt.s32.totalorder %s20, 0
        %s418 = scalar_select %p417, %s20, 0
        %p419 = scmp.lt.s32.totalorder %s416, 1
        %s420 = scalar_select %p419, %s416, 1
        %s421 = smul.addr %s418, 2
        %s422 = sadd.s32 %s420, %s421
        %s423 = smul.addr %s422, 8
        %s424 = scalar_lea.vmem %s2, %s423
        %p425 = pneg %p111
        %p426 = pneg %p108
        %p427 = scmp.lt.s32.totalorder %s20, 0
        %s428 = scalar_select %p427, %s20, 0
        %p429 = scmp.lt.s32.totalorder %s21, 1
        %s430 = scalar_select %p429, %s21, 1
        %s431 = smul.addr %s428, 2
        %s432 = sadd.s32 %s430, %s431
        %s433 = smul.addr %s432, 8
        %s434 = scalar_lea.vmem %s3, %s433
        %p435 = pneg %p139
        %p436 = pneg %p136
        %p437 = pneg %p167
        %p438 = pneg %p164
        %p439 = scmp.lt.s32.totalorder %s20, 0
        %s440 = scalar_select %p439, %s20, 0
        %p441 = scmp.lt.s32.totalorder %s21, 1
        %s442 = scalar_select %p441, %s21, 1
        %s443 = smul.addr %s440, 2
        %s444 = sadd.s32 %s442, %s443
        %s445 = smul.addr %s444, 8
        %s446 = scalar_lea.vmem %s4, %s445
        %s447 = smul.u32 32, %s22
        %p448 = scmp.lt.s32.totalorder %s21, 1
        %s449 = scalar_select %p448, %s21, 1
        %s450 = scalar_lea.vmem %s1, %s449
        %s451 = smul.u32 2, %s22
        %p452 = scmp.lt.s32.totalorder %s20, 0
        %s453 = scalar_select %p452, %s20, 0
        %p454 = scmp.lt.s32.totalorder %s451, 1
        %s455 = scalar_select %p454, %s451, 1
        %s456 = smul.addr %s453, 2
        %s457 = sadd.s32 %s455, %s456
        %s458 = smul.addr %s457, 8
        %s459 = scalar_lea.vmem %s2, %s458
        %s460 = smul.u32 2, %s22
        %p461 = scmp.lt.s32.totalorder %s20, 0
        %s462 = scalar_select %p461, %s20, 0
        %p463 = scmp.lt.s32.totalorder %s21, 1
        %s464 = scalar_select %p463, %s21, 1
        %s465 = smul.addr %s462, 2
        %s466 = sadd.s32 %s464, %s465
        %s467 = smul.addr %s466, 8
        %s468 = scalar_lea.vmem %s3, %s467
        %p469 = scmp.lt.s32.totalorder %s20, 0
        %s470 = scalar_select %p469, %s20, 0
        %p471 = scmp.lt.s32.totalorder %s21, 1
        %s472 = scalar_select %p471, %s21, 1
        %s473 = smul.addr %s470, 2
        %s474 = sadd.s32 %s472, %s473
        %s475 = smul.addr %s474, 8
        %s476 = scalar_lea.vmem %s4, %s475
        %p478 = scmp.eq.s32.totalorder %s22, 0
        // Predicated region
        $region78: #{_polar2cart.1} parent=72 // pred_check
          %p479 = pneg %p478
        $region79: #{_polar2cart.1} parent=72 // pred_check_branch
          %481 = sbr.rel (%p479) target = $region81
        $region80: #{_polar2cart.1} parent=72 // pred_region
          %v482 = vld [vmem:[%s450] sm:$0x1]
          %v483 = vld [vmem:[%s468] sm:$0xff]
          %v485 = vlaneseq
          %v486 = vshrl.u32 %v485, 7
          %v487 = vsub.s32 0, %v486
          %v488 = vrot.slane %v482, %v487
          %v490 = vmul.f32 %v488, %v483
          %491 = vst [vmem:[%s476] sm:$0xff] %v490
        $region81: #{_polar2cart.1} parent=72 // pred_fallthru
          _
        %v492 = vld [vmem:[%s476] sm:$0xff]
        %v493 = vld [vmem:[%s459] sm:$0xff]
        %v494 = vld [vmem:[%s459 + $0x8] sm:$0xff]
        %v495 = vpack.c.bf16 %v493, %v493
        %v496 = vpack.c.bf16 %v494, %v494
        %v497 = vld [vmem:[%s401] sm:$0xf]
        %v498 = vld [vmem:[%s401 + $0x4] sm:$0xf]
        %v499 = vld [vmem:[%s401 + $0x8] sm:$0xf]
        %v500 = vld [vmem:[%s401 + $0xc] sm:$0xf]
        %v501 = vld [vmem:[%s401 + $0x10] sm:$0xf]
        %v502 = vld [vmem:[%s401 + $0x14] sm:$0xf]
        %v503 = vld [vmem:[%s401 + $0x18] sm:$0xf]
        %v504 = vld [vmem:[%s401 + $0x1c] sm:$0xf]
        %v505 = vld [vmem:[%s401 + $0x20] sm:$0xf]
        %v506 = vld [vmem:[%s401 + $0x24] sm:$0xf]
        %v507 = vld [vmem:[%s401 + $0x28] sm:$0xf]
        %v508 = vld [vmem:[%s401 + $0x2c] sm:$0xf]
        %v509 = vld [vmem:[%s401 + $0x30] sm:$0xf]
        %v510 = vld [vmem:[%s401 + $0x34] sm:$0xf]
        %v511 = vld [vmem:[%s401 + $0x38] sm:$0xf]
        %v512 = vld [vmem:[%s401 + $0x3c] sm:$0xf]
        %v513 = vld [vmem:[%s401 + $0x40] sm:$0xf]
        %v514 = vld [vmem:[%s401 + $0x44] sm:$0xf]
        %v515 = vld [vmem:[%s401 + $0x48] sm:$0xf]
        %v516 = vld [vmem:[%s401 + $0x4c] sm:$0xf]
        %v517 = vld [vmem:[%s401 + $0x50] sm:$0xf]
        %v518 = vld [vmem:[%s401 + $0x54] sm:$0xf]
        %v519 = vld [vmem:[%s401 + $0x58] sm:$0xf]
        %v520 = vld [vmem:[%s401 + $0x5c] sm:$0xf]
        %v521 = vld [vmem:[%s401 + $0x60] sm:$0xf]
        %v522 = vld [vmem:[%s401 + $0x64] sm:$0xf]
        %v523 = vld [vmem:[%s401 + $0x68] sm:$0xf]
        %v524 = vld [vmem:[%s401 + $0x6c] sm:$0xf]
        %v525 = vld [vmem:[%s401 + $0x70] sm:$0xf]
        %v526 = vld [vmem:[%s401 + $0x74] sm:$0xf]
        %v527 = vld [vmem:[%s401 + $0x78] sm:$0xf]
        %v528 = vld [vmem:[%s401 + $0x7c] sm:$0xf]
        %v561 = vunpack.c.l.b16 %v497
        %v562 = vunpack.c.l.b16 %v498
        %v563 = vunpack.c.l.b16 %v499
        %v564 = vunpack.c.l.b16 %v500
        %v565 = vunpack.c.l.b16 %v501
        %v566 = vunpack.c.l.b16 %v502
        %v567 = vunpack.c.l.b16 %v503
        %v568 = vunpack.c.l.b16 %v504
        %v569 = vunpack.c.l.b16 %v505
        %v570 = vunpack.c.l.b16 %v506
        %v571 = vunpack.c.l.b16 %v507
        %v572 = vunpack.c.l.b16 %v508
        %v573 = vunpack.c.l.b16 %v509
        %v574 = vunpack.c.l.b16 %v510
        %v575 = vunpack.c.l.b16 %v511
        %v576 = vunpack.c.l.b16 %v512
        %v577 = vunpack.c.l.b16 %v513
        %v578 = vunpack.c.l.b16 %v514
        %v579 = vunpack.c.l.b16 %v515
        %v580 = vunpack.c.l.b16 %v516
        %v581 = vunpack.c.l.b16 %v517
        %v582 = vunpack.c.l.b16 %v518
        %v583 = vunpack.c.l.b16 %v519
        %v584 = vunpack.c.l.b16 %v520
        %v585 = vunpack.c.l.b16 %v521
        %v586 = vunpack.c.l.b16 %v522
        %v587 = vunpack.c.l.b16 %v523
        %v588 = vunpack.c.l.b16 %v524
        %v589 = vunpack.c.l.b16 %v525
        %v590 = vunpack.c.l.b16 %v526
        %v591 = vunpack.c.l.b16 %v527
        %v592 = vunpack.c.l.b16 %v528
        %v593 = vpack.c.b16 %v562, %v561
        %v594 = vpack.c.b16 %v564, %v563
        %v595 = vpack.c.b16 %v566, %v565
        %v596 = vpack.c.b16 %v568, %v567
        %v597 = vpack.c.b16 %v570, %v569
        %v598 = vpack.c.b16 %v572, %v571
        %v599 = vpack.c.b16 %v574, %v573
        %v600 = vpack.c.b16 %v576, %v575
        %v601 = vpack.c.b16 %v578, %v577
        %v602 = vpack.c.b16 %v580, %v579
        %v603 = vpack.c.b16 %v582, %v581
        %v604 = vpack.c.b16 %v584, %v583
        %v605 = vpack.c.b16 %v586, %v585
        %v606 = vpack.c.b16 %v588, %v587
        %v607 = vpack.c.b16 %v590, %v589
        %v608 = vpack.c.b16 %v592, %v591
        %625 = vmatprep.subr.bf16.mxu0 0
        %626 = vmatpush1.bf16.msra.mxu0 %v593
        %627 = vmatprep.subr.bf16.mxu0 0
        %628 = vmatpush1.bf16.msra.mxu0 %v594
        %629 = vmatprep.subr.bf16.mxu0 0
        %630 = vmatpush1.bf16.msra.mxu0 %v595
        %631 = vmatprep.subr.bf16.mxu0 0
        %632 = vmatpush1.bf16.msra.mxu0 %v596
        %633 = vmatprep.subr.bf16.mxu0 0
        %634 = vmatpush1.bf16.msra.mxu0 %v597
        %635 = vmatprep.subr.bf16.mxu0 0
        %636 = vmatpush1.bf16.msra.mxu0 %v598
        %637 = vmatprep.subr.bf16.mxu0 0
        %638 = vmatpush1.bf16.msra.mxu0 %v599
        %639 = vmatprep.subr.bf16.mxu0 0
        %640 = vmatpush1.bf16.msra.mxu0 %v600
        %641 = vmatprep.subr.bf16.mxu0 0
        %642 = vmatpush1.bf16.msra.mxu0 %v601
        %643 = vmatprep.subr.bf16.mxu0 0
        %644 = vmatpush1.bf16.msra.mxu0 %v602
        %645 = vmatprep.subr.bf16.mxu0 0
        %646 = vmatpush1.bf16.msra.mxu0 %v603
        %647 = vmatprep.subr.bf16.mxu0 0
        %648 = vmatpush1.bf16.msra.mxu0 %v604
        %649 = vmatprep.subr.bf16.mxu0 0
        %650 = vmatpush1.bf16.msra.mxu0 %v605
        %651 = vmatprep.subr.bf16.mxu0 0
        %652 = vmatpush1.bf16.msra.mxu0 %v606
        %653 = vmatprep.subr.bf16.mxu0 0
        %654 = vmatpush1.bf16.msra.mxu0 %v607
        %655 = vmatprep.subr.bf16.mxu0 0
        %656 = vmatpush1.bf16.msra.mxu0 %v608
        %657 = vmatprep.mubr.bf16.mxu0 %v496
        %658 = vmatmul.mubr.bf16.gmra.mrb[0].mxu0 %v495
        %v659 = vpop.f32.mrb[0].mxu0
        %v660 = vadd.f32 0.0, %v659
        %v661 = vpop.f32.mrb[0].mxu0
        %v662 = vpop.f32.mrb[0].mxu0
        %v663 = vpop.f32.mrb[0].mxu0
        %664 = vdwg.mxu0
        %v665 = vadd.f32 %v492, %v660
        %666 = vst [vmem:[%s476] sm:$0xff] %v665
        %p667 = scmp.lt.s32.totalorder %s20, 0
        %s668 = scalar_select %p667, %s20, 0
        %p669 = scmp.lt.s32.totalorder %s21, 1
        %s670 = scalar_select %p669, %s21, 1
        %s671 = smul.addr %s668, 2
        %s672 = sadd.s32 %s670, %s671
        %s673 = smul.addr %s672, 8
        %s674 = scalar_lea.vmem %s4, %s673
        // Predicated region
        $region82: #{_polar2cart.1} parent=72 // pred_check
          %p675 = pneg %p164
        $region83: #{_polar2cart.1} parent=72 // pred_check_branch
          %677 = sbr.rel (%p675) target = $region85
        $region84: #{_polar2cart.1} parent=72 // pred_region
          _
        $region85: #{_polar2cart.1} parent=72 // pred_fallthru
          _
      $region73: #{_polar2cart.1} parent=5 // pred_fallthru
        _
      %p678 = scmp.le.s32.totalorder 2, %s10
      // Predicated region
      $region86: #{_polar2cart.1} parent=5 // pred_check
        %p679 = pneg %p678
      $region87: #{_polar2cart.1} parent=5 // pred_check_branch
        %681 = sbr.rel (%p679) target = $region89
      $region88: #{_polar2cart.1} parent=5 // pred_region
        %s682 = ssub.s32 %s10, 2
        // Predicated region
        $region90: #{_polar2cart.1} parent=88 // pred_check
          %p683 = pneg %p170
        $region91: #{_polar2cart.1} parent=88 // pred_check_branch
          %685 = sbr.rel (%p683) target = $region93
        $region92: #{_polar2cart.1} parent=88 // pred_region
          %p686 = scmp.lt.s32.totalorder %s23, 0
          %s687 = scalar_select %p686, %s23, 0
          %p688 = scmp.lt.s32.totalorder %s24, 1
          %s689 = scalar_select %p688, %s24, 1
          %s690 = smul.addr %s687, 2
          %s691 = sadd.s32 %s689, %s690
          %s692 = smul.addr %s691, 8
          %s693 = scalar_lea.vmem %s4, %s692
        $region93: #{_polar2cart.1} parent=88 // pred_fallthru
          _
      $region89: #{_polar2cart.1} parent=5 // pred_fallthru
        _
    $region6: #{_polar2cart.1} parent=1 // loop_footer
      %s14 = sadd.s32 1, %s10
    $region7: #{_polar2cart.1} parent=1 // loop_footer_branch
      %9 = sbr.rel target = $region3
    $region8: #{_polar2cart.1} parent=1 // loop_exit
      _

</llo_original>
